<compile_context>
chip_gen: v7x
topology: tpu7x:2x2x1
jax: 0.10.0
libtpu: 0.0.40
codegen_flags: <defaults>
</compile_context>

<pallas_src>
import jax
import jax.numpy as jnp
from jax.experimental import pallas as pl
from jax.experimental.pallas import tpu as pltpu

HIDDEN = 256
IN_FEATURES = 4
OUT_FEATURES = 2
OUT_ROWS = 8            # output rows padded to one sublane group (full vst)
LANES = 128
DEFAULT_BLOCK_B = 8192  # batch tile (lane dimension); ~10 MiB VMEM per step


def mlp_kernel(xT_ref, w1_ref, b1_ref, w2_ref, b2_ref, oT_ref):
    # h^T = relu(W1 @ x^T + b1)                     -> (HIDDEN, tb)
    h = jnp.dot(w1_ref[...], xT_ref[...], preferred_element_type=jnp.float32)
    h = jnp.maximum(h + b1_ref[...], 0.0)
    # y^T = W2_pad @ h^T + b2_pad                   -> (OUT_ROWS, tb)
    y = jnp.dot(w2_ref[...], h.astype(w2_ref.dtype),
                preferred_element_type=jnp.float32)
    oT_ref[...] = (y + b2_ref[...]).astype(oT_ref.dtype)


def _round_up(n, m):
    return ((n + m - 1) // m) * m


def network_forward(x, w1, b1, w2, b2, *, block_b=DEFAULT_BLOCK_B,
                    use_bf16=False):
    """Forward pass of Linear(4,256) -> ReLU -> Linear(256,2).

    x:  (B, 4) f32
    w1: (256, 4), b1: (256, 1), w2: (2, 256), b2: (2, 1)  (PyTorch layout,
        biases as column vectors).
    Returns (B, 2) f32.
    """
    B = x.shape[0]
    compute_dtype = jnp.bfloat16 if use_bf16 else jnp.float32

    # Batch tile along the lane dimension: multiple of 128, capped at block_b.
    b_pad = _round_up(max(B, 1), LANES)
    tb = min(_round_up(block_b, LANES), b_pad)
    # Keep >= 2 grid steps when the batch allows it (dual-TC sharding on v7x).
    if b_pad >= 2 * LANES:
        tb = min(tb, _round_up((b_pad + 1) // 2, LANES))
    padded_B = _round_up(B, tb)
    grid = (padded_B // tb,)

    # Feature-major, lane-dense input (4, padded_B); the pad/transpose touches
    # only 4 rows, negligible vs. the old full-array pad + 128-lane output.
    xT = x.T
    if padded_B != B:
        xT = jnp.pad(xT, ((0, 0), (0, padded_B - B)))
    xT = xT.astype(compute_dtype)

    w1c = w1.astype(compute_dtype)                        # (HIDDEN, 4)
    b1c = b1.astype(jnp.float32)                          # (HIDDEN, 1)
    # Zero-pad the 2 output rows up to one sublane group of 8.
    w2c = jnp.pad(w2, ((0, OUT_ROWS - OUT_FEATURES), (0, 0))).astype(compute_dtype)
    b2c = jnp.pad(b2, ((0, OUT_ROWS - OUT_FEATURES), (0, 0))).astype(jnp.float32)

    itemsize = jnp.dtype(compute_dtype).itemsize
    flops = 2 * padded_B * (IN_FEATURES * HIDDEN + HIDDEN * OUT_ROWS)
    bytes_accessed = (
        padded_B * IN_FEATURES * itemsize                 # x^T
        + (HIDDEN * IN_FEATURES + OUT_ROWS * HIDDEN) * itemsize  # weights
        + (HIDDEN + OUT_ROWS) * 4                         # biases (f32)
        + padded_B * OUT_ROWS * 4                         # y^T (f32)
    )

    outT = pl.pallas_call(
        mlp_kernel,
        out_shape=jax.ShapeDtypeStruct((OUT_ROWS, padded_B), jnp.float32),
        grid_spec=pl.GridSpec(
            grid=grid,
            in_specs=[
                pl.BlockSpec((IN_FEATURES, tb), lambda i: (0, i)),       # x^T tile
                pl.BlockSpec((HIDDEN, IN_FEATURES), lambda i: (0, 0)),   # W1 resident
                pl.BlockSpec((HIDDEN, 1), lambda i: (0, 0)),             # b1 resident
                pl.BlockSpec((OUT_ROWS, HIDDEN), lambda i: (0, 0)),      # W2 resident
                pl.BlockSpec((OUT_ROWS, 1), lambda i: (0, 0)),           # b2 resident
            ],
            out_specs=pl.BlockSpec((OUT_ROWS, tb), lambda i: (0, i)),    # y^T tile
        ),
        compiler_params=pltpu.CompilerParams(
            dimension_semantics=("parallel",),
            vmem_limit_bytes=32 * 1024 * 1024),
        cost_estimate=pl.CostEstimate(
            flops=flops, transcendentals=0, bytes_accessed=bytes_accessed),
    )(xT, w1c, b1c, w2c, b2c)

    # Cheap epilogue: 2 contiguous rows -> (B, 2).
    return outT[:OUT_FEATURES, :B].T


def init_params(key):
    """nn.Linear default init (U[-1/sqrt(fan_in), +1/sqrt(fan_in)]), stored in
    PyTorch layout: weight (out, in), bias as a (out, 1) column."""
    k1, k2, k3, k4 = jax.random.split(key, 4)
    bound1 = 1.0 / jnp.sqrt(jnp.float32(IN_FEATURES))
    bound2 = 1.0 / jnp.sqrt(jnp.float32(HIDDEN))
    w1 = jax.random.uniform(k1, (HIDDEN, IN_FEATURES), jnp.float32, -bound1, bound1)
    b1 = jax.random.uniform(k2, (HIDDEN, 1), jnp.float32, -bound1, bound1)
    w2 = jax.random.uniform(k3, (OUT_FEATURES, HIDDEN), jnp.float32, -bound2, bound2)
    b2 = jax.random.uniform(k4, (OUT_FEATURES, 1), jnp.float32, -bound2, bound2)
    return w1, b1, w2, b2


def _reference(x, w1, b1, w2, b2):
    h = jnp.maximum(x @ w1.T + b1.T, 0.0)
    return h @ w2.T + b2.T


if __name__ == "__main__":
    key = jax.random.PRNGKey(0)
    kx, kp, kx2 = jax.random.split(key, 3)
    w1, b1, w2, b2 = init_params(kp)

    # Small check (batch=2) — the module's typical tiny input.
    batch = 2
    x = jax.random.normal(kx, (batch, IN_FEATURES), jnp.float32)
    out = jax.block_until_ready(network_forward(x, w1, b1, w2, b2))
    ref = _reference(x, w1, b1, w2, b2)
    assert out.shape == (batch, OUT_FEATURES)
    assert jnp.allclose(out, ref, atol=1e-5, rtol=1e-5)

    # Larger check exercising batch tiling + ragged padding (grid of 2 steps).
    batch2 = 300
    x2 = jax.random.normal(kx2, (batch2, IN_FEATURES), jnp.float32)
    out2 = jax.block_until_ready(
        network_forward(x2, w1, b1, w2, b2, block_b=256))
    ref2 = _reference(x2, w1, b1, w2, b2)
    assert out2.shape == (batch2, OUT_FEATURES)
    assert jnp.allclose(out2, ref2, atol=1e-5, rtol=1e-5)

    # Optional bf16 matmul-input path (f32 accumulation) — looser tolerance.
    out3 = jax.block_until_ready(
        network_forward(x2, w1, b1, w2, b2, use_bf16=True))
    assert out3.shape == (batch2, OUT_FEATURES)
    assert jnp.allclose(out3, ref2, atol=3e-2)

    print("KERNEL_OK")
</pallas_src>

<mosaic_0001>
module attributes {stable_mosaic.version = 11 : i64} {
  func.func @mlp_kernel(%arg0: i32, %arg1: memref<4x128xf32, #tpu.memory_space<vmem>>, %arg2: memref<256x4xf32, #tpu.memory_space<vmem>>, %arg3: memref<256x1xf32, #tpu.memory_space<vmem>>, %arg4: memref<8x256xf32, #tpu.memory_space<vmem>>, %arg5: memref<8x1xf32, #tpu.memory_space<vmem>>, %arg6: memref<8x128xf32, #tpu.memory_space<vmem>>) attributes {dimension_semantics = [#tpu.dimension_semantics<parallel>], iteration_bounds = array<i64: 1>, scalar_prefetch = 0 : i64, scratch_operands = 0 : i64, tpu.core_type = #tpu.core_type<tc>, window_params = [{transform_indices = @transform_0, window_bounds = array<i64: 4, 128>}, {pipeline_mode = #tpu.pipeline_mode<synchronous>, transform_indices = @transform_1, window_bounds = array<i64: 256, 4>}, {pipeline_mode = #tpu.pipeline_mode<synchronous>, transform_indices = @transform_2, window_bounds = array<i64: 256, 1>}, {pipeline_mode = #tpu.pipeline_mode<synchronous>, transform_indices = @transform_3, window_bounds = array<i64: 8, 256>}, {pipeline_mode = #tpu.pipeline_mode<synchronous>, transform_indices = @transform_4, window_bounds = array<i64: 8, 1>}, {transform_indices = @transform_5, window_bounds = array<i64: 8, 128>}]} {
    %c0 = arith.constant 0 : index
    %c0_0 = arith.constant 0 : index
    %0 = vector.load %arg2[%c0, %c0_0] : memref<256x4xf32, #tpu.memory_space<vmem>>, vector<256x4xf32>
    %c0_1 = arith.constant 0 : index
    %c0_2 = arith.constant 0 : index
    %1 = vector.load %arg1[%c0_1, %c0_2] : memref<4x128xf32, #tpu.memory_space<vmem>>, vector<4x128xf32>
    %cst = arith.constant dense<0.000000e+00> : vector<256x128xf32>
    %2 = tpu.matmul %0, %1, %cst {dimension_numbers = #tpu.dot_dimension_numbers<[1], [0], [0], [1], [0, 0, 1, 1], [], []>} : vector<256x4xf32>, vector<4x128xf32>, vector<256x128xf32> -> vector<256x128xf32>
    %c0_3 = arith.constant 0 : index
    %c0_4 = arith.constant 0 : index
    %3 = vector.load %arg3[%c0_3, %c0_4] : memref<256x1xf32, #tpu.memory_space<vmem>>, vector<256x1xf32>
    %4 = vector.broadcast %3 : vector<256x1xf32> to vector<256x128xf32>
    %5 = arith.addf %2, %4 : vector<256x128xf32>
    %cst_5 = arith.constant 0.000000e+00 : f32
    %6 = vector.broadcast %cst_5 : f32 to vector<256x128xf32>
    %7 = arith.maximumf %5, %6 : vector<256x128xf32>
    %c0_6 = arith.constant 0 : index
    %c0_7 = arith.constant 0 : index
    %8 = vector.load %arg4[%c0_6, %c0_7] : memref<8x256xf32, #tpu.memory_space<vmem>>, vector<8x256xf32>
    %cst_8 = arith.constant dense<0.000000e+00> : vector<8x128xf32>
    %9 = tpu.matmul %8, %7, %cst_8 {dimension_numbers = #tpu.dot_dimension_numbers<[1], [0], [0], [1], [0, 0, 1, 1], [], []>} : vector<8x256xf32>, vector<256x128xf32>, vector<8x128xf32> -> vector<8x128xf32>
    %c0_9 = arith.constant 0 : index
    %c0_10 = arith.constant 0 : index
    %10 = vector.load %arg5[%c0_9, %c0_10] : memref<8x1xf32, #tpu.memory_space<vmem>>, vector<8x1xf32>
    %11 = vector.broadcast %10 : vector<8x1xf32> to vector<8x128xf32>
    %12 = arith.addf %9, %11 : vector<8x128xf32>
    %c0_11 = arith.constant 0 : index
    %c0_12 = arith.constant 0 : index
    %13 = vector.load %arg6[%c0_11, %c0_12] : memref<8x128xf32, #tpu.memory_space<vmem>>, vector<8x128xf32>
    tpu.vector_store %arg6[%c0_11, %c0_12], %12 {strides = array<i32>} : memref<8x128xf32, #tpu.memory_space<vmem>>, vector<8x128xf32>,
    return
  }
  func.func @transform_0(%arg0: i32) -> (i32, i32) {
    %c0_i32 = arith.constant 0 : i32
    %c0_i32_0 = arith.constant 0 : i32
    return %c0_i32, %arg0 : i32, i32
  }
  func.func @transform_1(%arg0: i32) -> (i32, i32) {
    %c0_i32 = arith.constant 0 : i32
    %c0_i32_0 = arith.constant 0 : i32
    %c0_i32_1 = arith.constant 0 : i32
    return %c0_i32, %c0_i32_0 : i32, i32
  }
  func.func @transform_2(%arg0: i32) -> (i32, i32) {
    %c0_i32 = arith.constant 0 : i32
    %c0_i32_0 = arith.constant 0 : i32
    %c0_i32_1 = arith.constant 0 : i32
    return %c0_i32, %c0_i32_0 : i32, i32
  }
  func.func @transform_3(%arg0: i32) -> (i32, i32) {
    %c0_i32 = arith.constant 0 : i32
    %c0_i32_0 = arith.constant 0 : i32
    %c0_i32_1 = arith.constant 0 : i32
    return %c0_i32, %c0_i32_0 : i32, i32
  }
  func.func @transform_4(%arg0: i32) -> (i32, i32) {
    %c0_i32 = arith.constant 0 : i32
    %c0_i32_0 = arith.constant 0 : i32
    %c0_i32_1 = arith.constant 0 : i32
    return %c0_i32, %c0_i32_0 : i32, i32
  }
  func.func @transform_5(%arg0: i32) -> (i32, i32) {
    %c0_i32 = arith.constant 0 : i32
    %c0_i32_0 = arith.constant 0 : i32
    return %c0_i32, %arg0 : i32, i32
  }
}

</mosaic_0001>

<llo_original>
// kernel: tpu_custom_call.1
$region0: #{tpu_custom_call.1}
  #allocation0 [shape = 'u32[]', space=smem, size = 0x4, offset = 0x4, fixed_abs, tag = 'smem constant byte address 0x4 - core index']
  #allocation1 [shape = 'u32[144,128]{1,0:T(1,128)}', space=vmem, size = 0x12000, scoped, tag = 'internal scratch']
  %s0 = inlined_call_operand.vmem [shape: f32[4,128], index: 0, kind: input, shape index: {}]
  %s1 = inlined_call_operand.vmem [shape: f32[256,4], index: 1, kind: input, shape index: {}]
  %s2 = inlined_call_operand.vmem [shape: f32[256,1], index: 2, kind: input, shape index: {}]
  %s3 = inlined_call_operand.vmem [shape: f32[8,256], index: 3, kind: input, shape index: {}]
  %s4 = inlined_call_operand.vmem [shape: f32[8,1], index: 4, kind: input, shape index: {}]
  %s5 = inlined_call_operand.hbm [shape: f32[8,128], index: 5, kind: output, shape index: {}]
  %s6 = sld [smem:[#allocation0]]
  $region30: #{tpu_custom_call.1} parent=0
    _
  %s8 = ssub.s32 1, %s6
  %s9 = scalar_select 0, %s8, %s6
  $region1: #{tpu_custom_call.1} parent=0
    #allocation2 [shape = 'u8[4096]{0}', space=vmem, size = 0x1000, scoped, tag = 'output window, operand 0, single buffered']
    #allocation3 [shape = 's32[1]{0}', space=sflag, size = 0x4, scoped, tag = 'scoped memory for tpu_custom_call.1']
    %10 = vsyncpa [#allocation3], 0
    // Predicated region
    $region2: #{tpu_custom_call.1} parent=1 // pred_check
      _
    $region3: #{tpu_custom_call.1} parent=1 // pred_check_branch
      %12 = sbr.rel (0) target = $region5
    $region4: #{tpu_custom_call.1} parent=1 // pred_region
      _
    $region5: #{tpu_custom_call.1} parent=1 // pred_fallthru
      _
    // Predicated region
    $region6: #{tpu_custom_call.1} parent=1 // pred_check
      _
    $region7: #{tpu_custom_call.1} parent=1 // pred_check_branch
      %14 = sbr.rel (0) target = $region9
    $region8: #{tpu_custom_call.1} parent=1 // pred_region
      _
    $region9: #{tpu_custom_call.1} parent=1 // pred_fallthru
      _
    // Predicated region
    $region10: #{tpu_custom_call.1} parent=1 // pred_check
      _
    $region11: #{tpu_custom_call.1} parent=1 // pred_check_branch
      %16 = sbr.rel (0) target = $region13
    $region12: #{tpu_custom_call.1} parent=1 // pred_region
      _
    $region13: #{tpu_custom_call.1} parent=1 // pred_fallthru
      _
    // Predicated region
    $region14: #{tpu_custom_call.1} parent=1 // pred_check
      _
    $region15: #{tpu_custom_call.1} parent=1 // pred_check_branch
      %18 = sbr.rel (0) target = $region17
    $region16: #{tpu_custom_call.1} parent=1 // pred_region
      _
    $region17: #{tpu_custom_call.1} parent=1 // pred_fallthru
      _
    // Predicated region
    $region18: #{tpu_custom_call.1} parent=1 // pred_check
      _
    $region19: #{tpu_custom_call.1} parent=1 // pred_check_branch
      %20 = sbr.rel (0) target = $region21
    $region20: #{tpu_custom_call.1} parent=1 // pred_region
      _
    $region21: #{tpu_custom_call.1} parent=1 // pred_fallthru
      _
    %v21 = vld [vmem:[%s1] sm:$0xff]
    %v22 = vld [vmem:[%s1 + $0x8] sm:$0xff]
    %v23 = vld [vmem:[%s1 + $0x10] sm:$0xff]
    %v24 = vld [vmem:[%s1 + $0x18] sm:$0xff]
    %v25 = vld [vmem:[%s1 + $0x20] sm:$0xff]
    %v26 = vld [vmem:[%s1 + $0x28] sm:$0xff]
    %v27 = vld [vmem:[%s1 + $0x30] sm:$0xff]
    %v28 = vld [vmem:[%s1 + $0x38] sm:$0xff]
    %v29 = vld [vmem:[%s1 + $0x40] sm:$0xff]
    %v30 = vld [vmem:[%s1 + $0x48] sm:$0xff]
    %v31 = vld [vmem:[%s1 + $0x50] sm:$0xff]
    %v32 = vld [vmem:[%s1 + $0x58] sm:$0xff]
    %v33 = vld [vmem:[%s1 + $0x60] sm:$0xff]
    %v34 = vld [vmem:[%s1 + $0x68] sm:$0xff]
    %v35 = vld [vmem:[%s1 + $0x70] sm:$0xff]
    %v36 = vld [vmem:[%s1 + $0x78] sm:$0xff]
    %v37 = vld [vmem:[%s1 + $0x80] sm:$0xff]
    %v38 = vld [vmem:[%s1 + $0x88] sm:$0xff]
    %v39 = vld [vmem:[%s1 + $0x90] sm:$0xff]
    %v40 = vld [vmem:[%s1 + $0x98] sm:$0xff]
    %v41 = vld [vmem:[%s1 + $0xa0] sm:$0xff]
    %v42 = vld [vmem:[%s1 + $0xa8] sm:$0xff]
    %v43 = vld [vmem:[%s1 + $0xb0] sm:$0xff]
    %v44 = vld [vmem:[%s1 + $0xb8] sm:$0xff]
    %v45 = vld [vmem:[%s1 + $0xc0] sm:$0xff]
    %v46 = vld [vmem:[%s1 + $0xc8] sm:$0xff]
    %v47 = vld [vmem:[%s1 + $0xd0] sm:$0xff]
    %v48 = vld [vmem:[%s1 + $0xd8] sm:$0xff]
    %v49 = vld [vmem:[%s1 + $0xe0] sm:$0xff]
    %v50 = vld [vmem:[%s1 + $0xe8] sm:$0xff]
    %v51 = vld [vmem:[%s1 + $0xf0] sm:$0xff]
    %v52 = vld [vmem:[%s1 + $0xf8] sm:$0xff]
    %v53 = vld [vmem:[%s0] sm:$0xf]
    %v54 = vld [vmem:[%s2] sm:$0xff]
    %v55 = vld [vmem:[%s2 + $0x8] sm:$0xff]
    %v56 = vld [vmem:[%s2 + $0x10] sm:$0xff]
    %v57 = vld [vmem:[%s2 + $0x18] sm:$0xff]
    %v58 = vld [vmem:[%s2 + $0x20] sm:$0xff]
    %v59 = vld [vmem:[%s2 + $0x28] sm:$0xff]
    %v60 = vld [vmem:[%s2 + $0x30] sm:$0xff]
    %v61 = vld [vmem:[%s2 + $0x38] sm:$0xff]
    %v62 = vld [vmem:[%s2 + $0x40] sm:$0xff]
    %v63 = vld [vmem:[%s2 + $0x48] sm:$0xff]
    %v64 = vld [vmem:[%s2 + $0x50] sm:$0xff]
    %v65 = vld [vmem:[%s2 + $0x58] sm:$0xff]
    %v66 = vld [vmem:[%s2 + $0x60] sm:$0xff]
    %v67 = vld [vmem:[%s2 + $0x68] sm:$0xff]
    %v68 = vld [vmem:[%s2 + $0x70] sm:$0xff]
    %v69 = vld [vmem:[%s2 + $0x78] sm:$0xff]
    %v70 = vld [vmem:[%s2 + $0x80] sm:$0xff]
    %v71 = vld [vmem:[%s2 + $0x88] sm:$0xff]
    %v72 = vld [vmem:[%s2 + $0x90] sm:$0xff]
    %v73 = vld [vmem:[%s2 + $0x98] sm:$0xff]
    %v74 = vld [vmem:[%s2 + $0xa0] sm:$0xff]
    %v75 = vld [vmem:[%s2 + $0xa8] sm:$0xff]
    %v76 = vld [vmem:[%s2 + $0xb0] sm:$0xff]
    %v77 = vld [vmem:[%s2 + $0xb8] sm:$0xff]
    %v78 = vld [vmem:[%s2 + $0xc0] sm:$0xff]
    %v79 = vld [vmem:[%s2 + $0xc8] sm:$0xff]
    %v80 = vld [vmem:[%s2 + $0xd0] sm:$0xff]
    %v81 = vld [vmem:[%s2 + $0xd8] sm:$0xff]
    %v82 = vld [vmem:[%s2 + $0xe0] sm:$0xff]
    %v83 = vld [vmem:[%s2 + $0xe8] sm:$0xff]
    %v84 = vld [vmem:[%s2 + $0xf0] sm:$0xff]
    %v85 = vld [vmem:[%s2 + $0xf8] sm:$0xff]
    %87 = vset.pattern.permute.xlu0 0
    %88 = vperm.xlu0 %87, %v54
    %v89 = vpop.permute.xlu0 %88
    %92 = vset.pattern.permute.xlu0 0
    %93 = vperm.xlu0 %92, %v55
    %v94 = vpop.permute.xlu0 %93
    %97 = vset.pattern.permute.xlu0 0
    %98 = vperm.xlu0 %97, %v56
    %v99 = vpop.permute.xlu0 %98
    %102 = vset.pattern.permute.xlu0 0
    %103 = vperm.xlu0 %102, %v57
    %v104 = vpop.permute.xlu0 %103
    %107 = vset.pattern.permute.xlu0 0
    %108 = vperm.xlu0 %107, %v58
    %v109 = vpop.permute.xlu0 %108
    %112 = vset.pattern.permute.xlu0 0
    %113 = vperm.xlu0 %112, %v59
    %v114 = vpop.permute.xlu0 %113
    %117 = vset.pattern.permute.xlu0 0
    %118 = vperm.xlu0 %117, %v60
    %v119 = vpop.permute.xlu0 %118
    %122 = vset.pattern.permute.xlu0 0
    %123 = vperm.xlu0 %122, %v61
    %v124 = vpop.permute.xlu0 %123
    %127 = vset.pattern.permute.xlu0 0
    %128 = vperm.xlu0 %127, %v62
    %v129 = vpop.permute.xlu0 %128
    %132 = vset.pattern.permute.xlu0 0
    %133 = vperm.xlu0 %132, %v63
    %v134 = vpop.permute.xlu0 %133
    %137 = vset.pattern.permute.xlu0 0
    %138 = vperm.xlu0 %137, %v64
    %v139 = vpop.permute.xlu0 %138
    %142 = vset.pattern.permute.xlu0 0
    %143 = vperm.xlu0 %142, %v65
    %v144 = vpop.permute.xlu0 %143
    %147 = vset.pattern.permute.xlu0 0
    %148 = vperm.xlu0 %147, %v66
    %v149 = vpop.permute.xlu0 %148
    %152 = vset.pattern.permute.xlu0 0
    %153 = vperm.xlu0 %152, %v67
    %v154 = vpop.permute.xlu0 %153
    %157 = vset.pattern.permute.xlu0 0
    %158 = vperm.xlu0 %157, %v68
    %v159 = vpop.permute.xlu0 %158
    %162 = vset.pattern.permute.xlu0 0
    %163 = vperm.xlu0 %162, %v69
    %v164 = vpop.permute.xlu0 %163
    %167 = vset.pattern.permute.xlu0 0
    %168 = vperm.xlu0 %167, %v70
    %v169 = vpop.permute.xlu0 %168
    %172 = vset.pattern.permute.xlu0 0
    %173 = vperm.xlu0 %172, %v71
    %v174 = vpop.permute.xlu0 %173
    %177 = vset.pattern.permute.xlu0 0
    %178 = vperm.xlu0 %177, %v72
    %v179 = vpop.permute.xlu0 %178
    %182 = vset.pattern.permute.xlu0 0
    %183 = vperm.xlu0 %182, %v73
    %v184 = vpop.permute.xlu0 %183
    %187 = vset.pattern.permute.xlu0 0
    %188 = vperm.xlu0 %187, %v74
    %v189 = vpop.permute.xlu0 %188
    %192 = vset.pattern.permute.xlu0 0
    %193 = vperm.xlu0 %192, %v75
    %v194 = vpop.permute.xlu0 %193
    %197 = vset.pattern.permute.xlu0 0
    %198 = vperm.xlu0 %197, %v76
    %v199 = vpop.permute.xlu0 %198
    %202 = vset.pattern.permute.xlu0 0
    %203 = vperm.xlu0 %202, %v77
    %v204 = vpop.permute.xlu0 %203
    %207 = vset.pattern.permute.xlu0 0
    %208 = vperm.xlu0 %207, %v78
    %v209 = vpop.permute.xlu0 %208
    %212 = vset.pattern.permute.xlu0 0
    %213 = vperm.xlu0 %212, %v79
    %v214 = vpop.permute.xlu0 %213
    %217 = vset.pattern.permute.xlu0 0
    %218 = vperm.xlu0 %217, %v80
    %v219 = vpop.permute.xlu0 %218
    %222 = vset.pattern.permute.xlu0 0
    %223 = vperm.xlu0 %222, %v81
    %v224 = vpop.permute.xlu0 %223
    %227 = vset.pattern.permute.xlu0 0
    %228 = vperm.xlu0 %227, %v82
    %v229 = vpop.permute.xlu0 %228
    %232 = vset.pattern.permute.xlu0 0
    %233 = vperm.xlu0 %232, %v83
    %v234 = vpop.permute.xlu0 %233
    %237 = vset.pattern.permute.xlu0 0
    %238 = vperm.xlu0 %237, %v84
    %v239 = vpop.permute.xlu0 %238
    %242 = vset.pattern.permute.xlu0 0
    %243 = vperm.xlu0 %242, %v85
    %v244 = vpop.permute.xlu0 %243
    %vm246 = vcmask 31744
    %v248 = vsel %vm246, %v21, 0
    %v251 = vsel %vm246, %v22, 0
    %v254 = vsel %vm246, %v23, 0
    %v257 = vsel %vm246, %v24, 0
    %v260 = vsel %vm246, %v25, 0
    %v263 = vsel %vm246, %v26, 0
    %v266 = vsel %vm246, %v27, 0
    %v269 = vsel %vm246, %v28, 0
    %v272 = vsel %vm246, %v29, 0
    %v275 = vsel %vm246, %v30, 0
    %v278 = vsel %vm246, %v31, 0
    %v281 = vsel %vm246, %v32, 0
    %v284 = vsel %vm246, %v33, 0
    %v287 = vsel %vm246, %v34, 0
    %v290 = vsel %vm246, %v35, 0
    %v293 = vsel %vm246, %v36, 0
    %v296 = vsel %vm246, %v37, 0
    %v299 = vsel %vm246, %v38, 0
    %v302 = vsel %vm246, %v39, 0
    %v305 = vsel %vm246, %v40, 0
    %v308 = vsel %vm246, %v41, 0
    %v311 = vsel %vm246, %v42, 0
    %v314 = vsel %vm246, %v43, 0
    %v317 = vsel %vm246, %v44, 0
    %v320 = vsel %vm246, %v45, 0
    %v323 = vsel %vm246, %v46, 0
    %v326 = vsel %vm246, %v47, 0
    %v329 = vsel %vm246, %v48, 0
    %v332 = vsel %vm246, %v49, 0
    %v335 = vsel %vm246, %v50, 0
    %v338 = vsel %vm246, %v51, 0
    %v341 = vsel %vm246, %v52, 0
    %vm343 = vcmask 1043456
    %v345 = vsel %vm343, %v53, 0
    %347 = vmatprep.subr.mxu0 0.0
    %348 = vmatpush1.msra.mxu0 %v345
    %349 = vmatprep.subr.mxu0 0.0
    %350 = vmatpush1.msra.mxu0 0.0
    %351 = vmatprep.subr.mxu0 0.0
    %352 = vmatpush1.msra.mxu0 0.0
    %353 = vmatprep.subr.mxu0 0.0
    %354 = vmatpush1.msra.mxu0 0.0
    %355 = vmatprep.subr.mxu0 0.0
    %356 = vmatpush1.msra.mxu0 0.0
    %357 = vmatprep.subr.mxu0 0.0
    %358 = vmatpush1.msra.mxu0 0.0
    %359 = vmatprep.subr.mxu0 0.0
    %360 = vmatpush1.msra.mxu0 0.0
    %361 = vmatprep.subr.mxu0 0.0
    %362 = vmatpush1.msra.mxu0 0.0
    %363 = vmatprep.subr.mxu0 0.0
    %364 = vmatpush1.msra.mxu0 0.0
    %365 = vmatprep.subr.mxu0 0.0
    %366 = vmatpush1.msra.mxu0 0.0
    %367 = vmatprep.subr.mxu0 0.0
    %368 = vmatpush1.msra.mxu0 0.0
    %369 = vmatprep.subr.mxu0 0.0
    %370 = vmatpush1.msra.mxu0 0.0
    %371 = vmatprep.subr.mxu0 0.0
    %372 = vmatpush1.msra.mxu0 0.0
    %373 = vmatprep.subr.mxu0 0.0
    %374 = vmatpush1.msra.mxu0 0.0
    %375 = vmatprep.subr.mxu0 0.0
    %376 = vmatpush1.msra.mxu0 0.0
    %377 = vmatprep.subr.mxu0 0.0
    %378 = vmatpush1.msra.mxu0 0.0
    %379 = vmatprep.subr.mxu0 0.0
    %380 = vmatpush1.msra.mxu0 0.0
    %381 = vmatprep.subr.mxu0 0.0
    %382 = vmatpush1.msra.mxu0 0.0
    %383 = vmatprep.subr.mxu0 0.0
    %384 = vmatpush1.msra.mxu0 0.0
    %385 = vmatprep.subr.mxu0 0.0
    %386 = vmatpush1.msra.mxu0 0.0
    %387 = vmatprep.subr.mxu0 0.0
    %388 = vmatpush1.msra.mxu0 0.0
    %389 = vmatprep.subr.mxu0 0.0
    %390 = vmatpush1.msra.mxu0 0.0
    %391 = vmatprep.subr.mxu0 0.0
    %392 = vmatpush1.msra.mxu0 0.0
    %393 = vmatprep.subr.mxu0 0.0
    %394 = vmatpush1.msra.mxu0 0.0
    %395 = vmatprep.subr.mxu0 0.0
    %396 = vmatpush1.msra.mxu0 0.0
    %397 = vmatprep.subr.mxu0 0.0
    %398 = vmatpush1.msra.mxu0 0.0
    %399 = vmatprep.subr.mxu0 0.0
    %400 = vmatpush1.msra.mxu0 0.0
    %401 = vmatprep.subr.mxu0 0.0
    %402 = vmatpush1.msra.mxu0 0.0
    %403 = vmatprep.subr.mxu0 0.0
    %404 = vmatpush1.msra.mxu0 0.0
    %405 = vmatprep.subr.mxu0 0.0
    %406 = vmatpush1.msra.mxu0 0.0
    %407 = vmatprep.subr.mxu0 0.0
    %408 = vmatpush1.msra.mxu0 0.0
    %409 = vmatprep.subr.mxu0 0.0
    %410 = vmatpush1.msra.mxu0 0.0
    %411 = vmatprep.mubr.f32.mxu0 0.0
    %412 = vmatmul.mubr.f32.gmra.mrb[0].mxu0 %v248
    %v413 = vpop.f32.mrb[0].mxu0
    %v414 = vadd.f32 %v89, %v413
    %v415 = vpop.f32.mrb[0].mxu0
    %416 = vmatprep.mubr.f32.mxu0 0.0
    %417 = vmatmul.mubr.f32.gmra.mrb[0].mxu0 %v251
    %v418 = vpop.f32.mrb[0].mxu0
    %v419 = vadd.f32 %v94, %v418
    %v420 = vpop.f32.mrb[0].mxu0
    %421 = vmatprep.mubr.f32.mxu0 0.0
    %422 = vmatmul.mubr.f32.gmra.mrb[0].mxu0 %v254
    %v423 = vpop.f32.mrb[0].mxu0
    %v424 = vadd.f32 %v99, %v423
    %v425 = vpop.f32.mrb[0].mxu0
    %426 = vmatprep.mubr.f32.mxu0 0.0
    %427 = vmatmul.mubr.f32.gmra.mrb[0].mxu0 %v257
    %v428 = vpop.f32.mrb[0].mxu0
    %v429 = vadd.f32 %v104, %v428
    %v430 = vpop.f32.mrb[0].mxu0
    %431 = vmatprep.mubr.f32.mxu0 0.0
    %432 = vmatmul.mubr.f32.gmra.mrb[0].mxu0 %v260
    %v433 = vpop.f32.mrb[0].mxu0
    %v434 = vadd.f32 %v109, %v433
    %v435 = vpop.f32.mrb[0].mxu0
    %436 = vmatprep.mubr.f32.mxu0 0.0
    %437 = vmatmul.mubr.f32.gmra.mrb[0].mxu0 %v263
    %v438 = vpop.f32.mrb[0].mxu0
    %v439 = vadd.f32 %v114, %v438
    %v440 = vpop.f32.mrb[0].mxu0
    %441 = vmatprep.mubr.f32.mxu0 0.0
    %442 = vmatmul.mubr.f32.gmra.mrb[0].mxu0 %v266
    %v443 = vpop.f32.mrb[0].mxu0
    %v444 = vadd.f32 %v119, %v443
    %v445 = vpop.f32.mrb[0].mxu0
    %446 = vmatprep.mubr.f32.mxu0 0.0
    %447 = vmatmul.mubr.f32.gmra.mrb[0].mxu0 %v269
    %v448 = vpop.f32.mrb[0].mxu0
    %v449 = vadd.f32 %v124, %v448
    %v450 = vpop.f32.mrb[0].mxu0
    %451 = vmatprep.mubr.f32.mxu0 0.0
    %452 = vmatmul.mubr.f32.gmra.mrb[0].mxu0 %v272
    %v453 = vpop.f32.mrb[0].mxu0
    %v454 = vadd.f32 %v129, %v453
    %v455 = vpop.f32.mrb[0].mxu0
    %456 = vmatprep.mubr.f32.mxu0 0.0
    %457 = vmatmul.mubr.f32.gmra.mrb[0].mxu0 %v275
    %v458 = vpop.f32.mrb[0].mxu0
    %v459 = vadd.f32 %v134, %v458
    %v460 = vpop.f32.mrb[0].mxu0
    %461 = vmatprep.mubr.f32.mxu0 0.0
    %462 = vmatmul.mubr.f32.gmra.mrb[0].mxu0 %v278
    %v463 = vpop.f32.mrb[0].mxu0
    %v464 = vadd.f32 %v139, %v463
    %v465 = vpop.f32.mrb[0].mxu0
    %466 = vmatprep.mubr.f32.mxu0 0.0
    %467 = vmatmul.mubr.f32.gmra.mrb[0].mxu0 %v281
    %v468 = vpop.f32.mrb[0].mxu0
    %v469 = vadd.f32 %v144, %v468
    %v470 = vpop.f32.mrb[0].mxu0
    %471 = vmatprep.mubr.f32.mxu0 0.0
    %472 = vmatmul.mubr.f32.gmra.mrb[0].mxu0 %v284
    %v473 = vpop.f32.mrb[0].mxu0
    %v474 = vadd.f32 %v149, %v473
    %v475 = vpop.f32.mrb[0].mxu0
    %476 = vmatprep.mubr.f32.mxu0 0.0
    %477 = vmatmul.mubr.f32.gmra.mrb[0].mxu0 %v287
    %v478 = vpop.f32.mrb[0].mxu0
    %v479 = vadd.f32 %v154, %v478
    %v480 = vpop.f32.mrb[0].mxu0
    %481 = vmatprep.mubr.f32.mxu0 0.0
    %482 = vmatmul.mubr.f32.gmra.mrb[0].mxu0 %v290
    %v483 = vpop.f32.mrb[0].mxu0
    %v484 = vadd.f32 %v159, %v483
    %v485 = vpop.f32.mrb[0].mxu0
    %486 = vmatprep.mubr.f32.mxu0 0.0
    %487 = vmatmul.mubr.f32.gmra.mrb[0].mxu0 %v293
    %v488 = vpop.f32.mrb[0].mxu0
    %v489 = vadd.f32 %v164, %v488
    %v490 = vpop.f32.mrb[0].mxu0
    %491 = vmatprep.mubr.f32.mxu0 0.0
    %492 = vmatmul.mubr.f32.gmra.mrb[0].mxu0 %v296
    %v493 = vpop.f32.mrb[0].mxu0
    %v494 = vadd.f32 %v169, %v493
    %v495 = vpop.f32.mrb[0].mxu0
    %496 = vmatprep.mubr.f32.mxu0 0.0
    %497 = vmatmul.mubr.f32.gmra.mrb[0].mxu0 %v299
    %v498 = vpop.f32.mrb[0].mxu0
    %v499 = vadd.f32 %v174, %v498
    %v500 = vpop.f32.mrb[0].mxu0
    %501 = vmatprep.mubr.f32.mxu0 0.0
    %502 = vmatmul.mubr.f32.gmra.mrb[0].mxu0 %v302
    %v503 = vpop.f32.mrb[0].mxu0
    %v504 = vadd.f32 %v179, %v503
    %v505 = vpop.f32.mrb[0].mxu0
    %506 = vmatprep.mubr.f32.mxu0 0.0
    %507 = vmatmul.mubr.f32.gmra.mrb[0].mxu0 %v305
    %v508 = vpop.f32.mrb[0].mxu0
    %v509 = vadd.f32 %v184, %v508
    %v510 = vpop.f32.mrb[0].mxu0
    %511 = vmatprep.mubr.f32.mxu0 0.0
    %512 = vmatmul.mubr.f32.gmra.mrb[0].mxu0 %v308
    %v513 = vpop.f32.mrb[0].mxu0
    %v514 = vadd.f32 %v189, %v513
    %v515 = vpop.f32.mrb[0].mxu0
    %516 = vmatprep.mubr.f32.mxu0 0.0
    %517 = vmatmul.mubr.f32.gmra.mrb[0].mxu0 %v311
    %v518 = vpop.f32.mrb[0].mxu0
    %v519 = vadd.f32 %v194, %v518
    %v520 = vpop.f32.mrb[0].mxu0
    %521 = vmatprep.mubr.f32.mxu0 0.0
    %522 = vmatmul.mubr.f32.gmra.mrb[0].mxu0 %v314
    %v523 = vpop.f32.mrb[0].mxu0
    %v524 = vadd.f32 %v199, %v523
    %v525 = vpop.f32.mrb[0].mxu0
    %526 = vmatprep.mubr.f32.mxu0 0.0
    %527 = vmatmul.mubr.f32.gmra.mrb[0].mxu0 %v317
    %v528 = vpop.f32.mrb[0].mxu0
    %v529 = vadd.f32 %v204, %v528
    %v530 = vpop.f32.mrb[0].mxu0
    %531 = vmatprep.mubr.f32.mxu0 0.0
    %532 = vmatmul.mubr.f32.gmra.mrb[0].mxu0 %v320
    %v533 = vpop.f32.mrb[0].mxu0
    %v534 = vadd.f32 %v209, %v533
    %v535 = vpop.f32.mrb[0].mxu0
    %536 = vmatprep.mubr.f32.mxu0 0.0
    %537 = vmatmul.mubr.f32.gmra.mrb[0].mxu0 %v323
    %v538 = vpop.f32.mrb[0].mxu0
    %v539 = vadd.f32 %v214, %v538
    %v540 = vpop.f32.mrb[0].mxu0
    %541 = vmatprep.mubr.f32.mxu0 0.0
    %542 = vmatmul.mubr.f32.gmra.mrb[0].mxu0 %v326
    %v543 = vpop.f32.mrb[0].mxu0
    %v544 = vadd.f32 %v219, %v543
    %v545 = vpop.f32.mrb[0].mxu0
    %546 = vmatprep.mubr.f32.mxu0 0.0
    %547 = vmatmul.mubr.f32.gmra.mrb[0].mxu0 %v329
    %v548 = vpop.f32.mrb[0].mxu0
    %v549 = vadd.f32 %v224, %v548
    %v550 = vpop.f32.mrb[0].mxu0
    %551 = vmatprep.mubr.f32.mxu0 0.0
    %552 = vmatmul.mubr.f32.gmra.mrb[0].mxu0 %v332
    %v553 = vpop.f32.mrb[0].mxu0
    %v554 = vadd.f32 %v229, %v553
    %v555 = vpop.f32.mrb[0].mxu0
    %556 = vmatprep.mubr.f32.mxu0 0.0
    %557 = vmatmul.mubr.f32.gmra.mrb[0].mxu0 %v335
    %v558 = vpop.f32.mrb[0].mxu0
    %v559 = vadd.f32 %v234, %v558
    %v560 = vpop.f32.mrb[0].mxu0
    %561 = vmatprep.mubr.f32.mxu0 0.0
    %562 = vmatmul.mubr.f32.gmra.mrb[0].mxu0 %v338
    %v563 = vpop.f32.mrb[0].mxu0
    %v564 = vadd.f32 %v239, %v563
    %v565 = vpop.f32.mrb[0].mxu0
    %566 = vmatprep.mubr.f32.mxu0 0.0
    %567 = vmatmul.mubr.f32.gmra.mrb[0].mxu0 %v341
    %v568 = vpop.f32.mrb[0].mxu0
    %v569 = vadd.f32 %v244, %v568
    %v570 = vpop.f32.mrb[0].mxu0
    %571 = vdwg.mxu0
    %v572 = vmax.f32 %v414, 0.0
    %v573 = vmax.f32 %v419, 0.0
    %v574 = vmax.f32 %v424, 0.0
    %v575 = vmax.f32 %v429, 0.0
    %v576 = vmax.f32 %v434, 0.0
    %v577 = vmax.f32 %v439, 0.0
    %v578 = vmax.f32 %v444, 0.0
    %v579 = vmax.f32 %v449, 0.0
    %v580 = vmax.f32 %v454, 0.0
    %v581 = vmax.f32 %v459, 0.0
    %v582 = vmax.f32 %v464, 0.0
    %v583 = vmax.f32 %v469, 0.0
    %v584 = vmax.f32 %v474, 0.0
    %v585 = vmax.f32 %v479, 0.0
    %v586 = vmax.f32 %v484, 0.0
    %v587 = vmax.f32 %v489, 0.0
    %v588 = vmax.f32 %v494, 0.0
    %v589 = vmax.f32 %v499, 0.0
    %v590 = vmax.f32 %v504, 0.0
    %v591 = vmax.f32 %v509, 0.0
    %v592 = vmax.f32 %v514, 0.0
    %v593 = vmax.f32 %v519, 0.0
    %v594 = vmax.f32 %v524, 0.0
    %v595 = vmax.f32 %v529, 0.0
    %v596 = vmax.f32 %v534, 0.0
    %v597 = vmax.f32 %v539, 0.0
    %v598 = vmax.f32 %v544, 0.0
    %v599 = vmax.f32 %v549, 0.0
    %v600 = vmax.f32 %v554, 0.0
    %v601 = vmax.f32 %v559, 0.0
    %v602 = vmax.f32 %v564, 0.0
    %v603 = vmax.f32 %v569, 0.0
    %v604 = vld [vmem:[%s3] sm:$0xff]
    %v605 = vld [vmem:[%s3 + $0x8] sm:$0xff]
    %v606 = vld [vmem:[%s4] sm:$0xff]
    %608 = vset.pattern.permute.xlu0 0
    %609 = vperm.xlu0 %608, %v606
    %v610 = vpop.permute.xlu0 %609
    %612 = vmatprep.subr.mxu0 0.0
    %613 = vmatpush1.msra.mxu0 %v572
    %614 = vmatprep.subr.mxu0 0.0
    %615 = vmatpush1.msra.mxu0 %v573
    %616 = vmatprep.subr.mxu0 0.0
    %617 = vmatpush1.msra.mxu0 %v574
    %618 = vmatprep.subr.mxu0 0.0
    %619 = vmatpush1.msra.mxu0 %v575
    %620 = vmatprep.subr.mxu0 0.0
    %621 = vmatpush1.msra.mxu0 %v576
    %622 = vmatprep.subr.mxu0 0.0
    %623 = vmatpush1.msra.mxu0 %v577
    %624 = vmatprep.subr.mxu0 0.0
    %625 = vmatpush1.msra.mxu0 %v578
    %626 = vmatprep.subr.mxu0 0.0
    %627 = vmatpush1.msra.mxu0 %v579
    %628 = vmatprep.subr.mxu0 0.0
    %629 = vmatpush1.msra.mxu0 %v580
    %630 = vmatprep.subr.mxu0 0.0
    %631 = vmatpush1.msra.mxu0 %v581
    %632 = vmatprep.subr.mxu0 0.0
    %633 = vmatpush1.msra.mxu0 %v582
    %634 = vmatprep.subr.mxu0 0.0
    %635 = vmatpush1.msra.mxu0 %v583
    %636 = vmatprep.subr.mxu0 0.0
    %637 = vmatpush1.msra.mxu0 %v584
    %638 = vmatprep.subr.mxu0 0.0
    %639 = vmatpush1.msra.mxu0 %v585
    %640 = vmatprep.subr.mxu0 0.0
    %641 = vmatpush1.msra.mxu0 %v586
    %642 = vmatprep.subr.mxu0 0.0
    %643 = vmatpush1.msra.mxu0 %v587
    %644 = vmatprep.subr.mxu0 0.0
    %645 = vmatpush1.msra.mxu0 %v588
    %646 = vmatprep.subr.mxu0 0.0
    %647 = vmatpush1.msra.mxu0 %v589
    %648 = vmatprep.subr.mxu0 0.0
    %649 = vmatpush1.msra.mxu0 %v590
    %650 = vmatprep.subr.mxu0 0.0
    %651 = vmatpush1.msra.mxu0 %v591
    %652 = vmatprep.subr.mxu0 0.0
    %653 = vmatpush1.msra.mxu0 %v592
    %654 = vmatprep.subr.mxu0 0.0
    %655 = vmatpush1.msra.mxu0 %v593
    %656 = vmatprep.subr.mxu0 0.0
    %657 = vmatpush1.msra.mxu0 %v594
    %658 = vmatprep.subr.mxu0 0.0
    %659 = vmatpush1.msra.mxu0 %v595
    %660 = vmatprep.subr.mxu0 0.0
    %661 = vmatpush1.msra.mxu0 %v596
    %662 = vmatprep.subr.mxu0 0.0
    %663 = vmatpush1.msra.mxu0 %v597
    %664 = vmatprep.subr.mxu0 0.0
    %665 = vmatpush1.msra.mxu0 %v598
    %666 = vmatprep.subr.mxu0 0.0
    %667 = vmatpush1.msra.mxu0 %v599
    %668 = vmatprep.subr.mxu0 0.0
    %669 = vmatpush1.msra.mxu0 %v600
    %670 = vmatprep.subr.mxu0 0.0
    %671 = vmatpush1.msra.mxu0 %v601
    %672 = vmatprep.subr.mxu0 0.0
    %673 = vmatpush1.msra.mxu0 %v602
    %674 = vmatprep.subr.mxu0 0.0
    %675 = vmatpush1.msra.mxu0 %v603
    %676 = vmatprep.mubr.f32.mxu0 %v605
    %677 = vmatmul.mubr.f32.gmra.mrb[0].mxu0 %v604
    %v678 = vpop.f32.mrb[0].mxu0
    %v679 = vadd.f32 %v610, %v678
    %v680 = vpop.f32.mrb[0].mxu0
    %681 = vdwg.mxu0
    %682 = vst [vmem:[#allocation2] sm:$0xff] %v679
    // Predicated region
    $region22: #{tpu_custom_call.1} parent=1 // pred_check
      _
    $region23: #{tpu_custom_call.1} parent=1 // pred_check_branch
      %684 = sbr.rel (0) target = $region25
    $region24: #{tpu_custom_call.1} parent=1 // pred_region
      %s686 = ssub.s32 128, 128
      %687 = vsyncadd [#allocation3], %s686
      %s689 = sshll.u32 [#allocation2], 4
      %s690 = int_to_ptr.vmem [resolvable:$true] %s689
      %692 = dma.vmem_to_hbm [thread:$0]  %s690, 128, %s5, [#allocation3]
    $region25: #{tpu_custom_call.1} parent=1 // pred_fallthru
      _
    // Predicated region
    $region26: #{tpu_custom_call.1} parent=1 // pred_check
      _
    $region27: #{tpu_custom_call.1} parent=1 // pred_check_branch
      %694 = sbr.rel (0) target = $region29
    $region28: #{tpu_custom_call.1} parent=1 // pred_region
      %695 = dma.done [#allocation3], 128
    $region29: #{tpu_custom_call.1} parent=1 // pred_fallthru
      _
    %696 = vsyncpa [#allocation3], 1

</llo_original>
